<compile_context>
chip_gen: v7x
topology: tpu7x:2x2x1
jax: 0.10.0
libtpu: 0.0.40
codegen_flags: <defaults>
</compile_context>

<pallas_src>
import re

import jax
import jax.numpy as jnp
from jax import lax
from jax.experimental import pallas as pl
from jax.experimental.pallas import tpu as pltpu


# ============================================================================
# Generation-aware configuration helpers
# ============================================================================
def _tpu_generation():
    try:
        kind = jax.devices()[0].device_kind.lower()
    except Exception:
        return None
    m = re.search(r"v(\d+)", kind)
    return int(m.group(1)) if m else None


def _vmem_capacity_bytes(gen):
    try:
        cap = int(pltpu.get_tpu_info().vmem_capacity_bytes)
        if cap > 0:
            return cap
    except Exception:
        pass
    if gen is not None and gen >= 7:
        return 64 * 1024 * 1024
    if gen in (5, 6):
        return 128 * 1024 * 1024
    return 64 * 1024 * 1024      # unknown: be conservative


def _pick_tile(total, target, align):
    """Largest aligned divisor of `total` that is <= target (or `total`)."""
    if total <= target or total % align != 0:
        return total
    t = (target // align) * align
    while t >= align:
        if total % t == 0:
            return t
        t -= align
    return total


# ============================================================================
# Kernel 1: tiled LM-head matmul + online-softmax masked cross-entropy
#   h:   (N, D)  bf16   flattened last hidden states
#   w:   (D, V)  bf16   LM-head weight (x @ w layout)
#   b:   (1, V)  f32    LM-head bias
#   lab: (N, 1)  int32  labels (-100 = ignore)
# output: (G, S, 128) f32 -- per row tile: lane0 = masked NLL sum, lane1 = count
# ============================================================================
def _build_ce_kernel(*, tm, tv, S, exp_dtype, pinned):
    def _compute(h_tile, w_ref, b_ref, lab_ref, out_ref, stats):
        v = pl.program_id(1)                 # vocab tile index (reduction axis)
        s = pl.program_id(2)                 # row tile index within this shard
        n_v = pl.num_programs(1)
        row = pl.multiple_of(s * tm, tm)     # offset into per-shard scratch

        # ---- init packed running stats (m, l, pick) at the first vocab tile --
        @pl.when(v == 0)
        def _init():
            stats[pl.ds(row, tm), pl.ds(0, 1)] = jnp.full((tm, 1), -1e30,
                                                          jnp.float32)
            stats[pl.ds(row, tm), pl.ds(1, 1)] = jnp.zeros((tm, 1), jnp.float32)
            stats[pl.ds(row, tm), pl.ds(2, 1)] = jnp.zeros((tm, 1), jnp.float32)

        # ---- MXU: bf16 x bf16 -> f32 logits tile ------------------------------
        logits = jnp.dot(h_tile, w_ref[...],
                         preferred_element_type=jnp.float32) + b_ref[...]

        labels = lab_ref[...]                       # (tm, 1) int32
        lab_local = labels - v * tv                 # compare against LOCAL iota
        col = lax.broadcasted_iota(jnp.int32, (tm, tv), 1)
        # raw logit at the label, accumulated independently of the running max
        pick_inc = jnp.sum(jnp.where(col == lab_local, logits, 0.0),
                           axis=-1, keepdims=True)
        stats[pl.ds(row, tm), pl.ds(2, 1)] += pick_inc

        # ---- online softmax: running max / running sum-exp (f32 state) --------
        m_prev = stats[pl.ds(row, tm), pl.ds(0, 1)]
        l_prev = stats[pl.ds(row, tm), pl.ds(1, 1)]
        m_new = jnp.maximum(m_prev, jnp.max(logits, axis=-1, keepdims=True))
        # big (tm, tv) exp in bf16 on v6e/v7x (EUP bf16 path), f32 on v5e
        p = jnp.exp((logits - m_new).astype(exp_dtype)).astype(jnp.float32)
        l_new = (l_prev * jnp.exp(m_prev - m_new)
                 + jnp.sum(p, axis=-1, keepdims=True))
        stats[pl.ds(row, tm), pl.ds(0, 1)] = m_new
        stats[pl.ds(row, tm), pl.ds(1, 1)] = l_new

        # ---- finalize: reduced (sum, count) per row tile, lane-dense row ------
        @pl.when(v == n_v - 1)
        def _finalize():
            valid = labels != -100
            lse = m_new + jnp.log(l_new)
            nll = jnp.where(valid, lse - stats[pl.ds(row, tm), pl.ds(2, 1)], 0.0)
            loss_sum = jnp.sum(nll)
            cnt = jnp.sum(valid.astype(jnp.float32))
            lane = lax.broadcasted_iota(jnp.int32, (1, 128), 1)
            out_row = jnp.where(lane == 0, loss_sum,
                                jnp.where(lane == 1, cnt, 0.0))
            out_ref[:, pl.ds(s, 1), :] = out_row.reshape(1, 1, 128)

    if pinned:
        def kernel(h_hbm, w_ref, b_ref, lab_ref, out_ref, h_vmem, stats, dma_sem):
            g = pl.program_id(0)
            v = pl.program_id(1)
            s = pl.program_id(2)

            # one HBM->VMEM copy of this shard's hidden rows per shard
            @pl.when((v == 0) & (s == 0))
            def _load_shard():
                cp = pltpu.make_async_copy(
                    h_hbm.at[pl.ds(g * (S * tm), S * tm), :],
                    h_vmem, dma_sem.at[0])
                cp.start()
                cp.wait()

            row = pl.multiple_of(s * tm, tm)
            _compute(h_vmem[pl.ds(row, tm), :], w_ref, b_ref, lab_ref,
                     out_ref, stats)
        return kernel

    def kernel(h_ref, w_ref, b_ref, lab_ref, out_ref, stats):
        _compute(h_ref[...], w_ref, b_ref, lab_ref, out_ref, stats)
    return kernel


def lmhead_cross_entropy(h_flat, w_lm, b_lm, labels_flat, *,
                         tm=None, tv=None, num_row_shards=None, pin_h=None):
    """Mean masked CE over logits = h_flat @ w_lm + b_lm (ignore_index=-100)."""
    N, D = h_flat.shape
    V = w_lm.shape[1]

    gen = _tpu_generation()
    vmem_cap = _vmem_capacity_bytes(gen)

    # --- generation-aware tile / shard / VMEM configuration -------------------
    if gen is not None and gen >= 7:       # 64 MiB VMEM, 2 TensorCores / chip
        tm_target, tv_target, default_shards = 256, 2048, 2
    elif gen in (5, 6):                     # 128 MiB VMEM, 1 TensorCore / chip
        tm_target, tv_target, default_shards = 512, 4096, 1
    else:                                   # unknown: conservative
        tm_target, tv_target, default_shards = 256, 2048, 1

    if tm is None:
        tm = _pick_tile(N, tm_target, 128)
    if tv is None:
        tv = _pick_tile(V, tv_target, 128)
    assert N % tm == 0 and (tm == N or tm % 8 == 0), (N, tm)
    assert V % tv == 0 and (tv == V or tv % 128 == 0), (V, tv)

    n_row_tiles = N // tm
    n_vtiles = V // tv

    if num_row_shards is None:
        num_row_shards = default_shards
    G = num_row_shards if (num_row_shards >= 1
                           and n_row_tiles % num_row_shards == 0) else 1
    S = n_row_tiles // G

    # Pin the whole row shard of h in VMEM (read h from HBM once per shard
    # instead of once per vocab tile) whenever it comfortably fits.
    shard_bytes = S * tm * D * 2            # bf16
    if pin_h is None:
        pin_h = shard_bytes <= vmem_cap // 5

    exp_dtype = jnp.bfloat16 if (gen is not None and gen >= 6) else jnp.float32

    vmem_limit = int(0.78 * vmem_cap)
    if gen is not None and gen >= 7:
        vmem_limit = min(vmem_limit, 50 * 1024 * 1024)
    vmem_limit = max(32 * 1024 * 1024, min(vmem_limit, 100 * 1024 * 1024))

    h_bf = h_flat.astype(jnp.bfloat16)      # bf16 MXU inputs, f32 accumulation
    w_bf = w_lm.astype(jnp.bfloat16)
    b2 = b_lm.reshape(1, V).astype(jnp.float32)
    lab2 = labels_flat.reshape(N, 1).astype(jnp.int32)

    kernel = _build_ce_kernel(tm=tm, tv=tv, S=S, exp_dtype=exp_dtype,
                              pinned=pin_h)

    if pin_h:
        h_spec = pl.BlockSpec(memory_space=pl.ANY)
        scratch = [pltpu.VMEM((S * tm, D), jnp.bfloat16),     # pinned h shard
                   pltpu.VMEM((S * tm, 3), jnp.float32),      # packed m/l/pick
                   pltpu.SemaphoreType.DMA((1,))]
        h_bytes = N * D * 2                                   # read once
    else:
        h_spec = pl.BlockSpec((tm, D), lambda g, v, s: (g * S + s, 0))
        scratch = [pltpu.VMEM((S * tm, 3), jnp.float32)]
        h_bytes = N * D * 2 * n_vtiles                        # re-streamed

    out_tiles = pl.pallas_call(
        kernel,
        grid_spec=pltpu.PrefetchScalarGridSpec(
            num_scalar_prefetch=0,
            grid=(G, n_vtiles, S),          # S innermost: weight tile resident
            in_specs=[
                h_spec,
                pl.BlockSpec((D, tv), lambda g, v, s: (0, v)),          # weight
                pl.BlockSpec((1, tv), lambda g, v, s: (0, v)),          # bias
                pl.BlockSpec((tm, 1), lambda g, v, s: (g * S + s, 0)),  # labels
            ],
            # block index depends only on g -> one writeback per shard, fully
            # written during the last vocab pass (no stale intermediate stores)
            out_specs=pl.BlockSpec((1, S, 128), lambda g, v, s: (g, 0, 0)),
            scratch_shapes=scratch,
        ),
        out_shape=jax.ShapeDtypeStruct((G, S, 128), jnp.float32),
        compiler_params=pltpu.CompilerParams(
            dimension_semantics=("parallel", "arbitrary", "arbitrary"),
            vmem_limit_bytes=vmem_limit),
        cost_estimate=pl.CostEstimate(
            flops=2 * N * D * V,
            transcendentals=N * V,
            bytes_accessed=(h_bytes + G * D * V * 2 + V * 4
                            + N * 4 * n_vtiles + G * S * 128 * 4)),
    )(h_bf, w_bf, b2, lab2)

    loss_sum = jnp.sum(out_tiles[..., 0])
    valid_cnt = jnp.sum(out_tiles[..., 1])
    # torch CrossEntropyLoss(ignore_index=-100): mean over valid targets
    # (NaN when every label is ignored, matching torch).
    return loss_sum / valid_cnt


# ============================================================================
# Kernel 2: fused pooler (dense + tanh) + contrastive loss -> (1,1) scalar
#   cls / cls_minus / cls_plus: (B, D) f32 CLS hidden states
#   wt_dense: (D_in, D_out) = torch weight pre-transposed on the host
# ============================================================================
def _pool_cl_kernel(cls_ref, clsm_ref, clsp_ref, wt_ref, b_ref, out_ref):
    wt = wt_ref[...]                     # (D, D), already transposed on host
    b = b_ref[...]                       # (1, D)

    def pool(x):                         # tanh(x @ W^T + b), standard contraction
        return jnp.tanh(jnp.dot(x, wt, preferred_element_type=jnp.float32) + b)

    p = pool(cls_ref[...])               # pooling        (from outputs)
    pp = pool(clsm_ref[...])             # pooling_plus   (from outputs_minus)
    pm = pool(clsp_ref[...])             # pooling_minus  (from outputs_plus)

    def cos(a, c):
        ab = jnp.sum(a * c, axis=-1, keepdims=True)
        aa = jnp.sum(a * a, axis=-1, keepdims=True)
        cc = jnp.sum(c * c, axis=-1, keepdims=True)
        return ab * lax.rsqrt(aa * cc + 1e-16)   # EUP rsqrt instead of sqrt+div

    temp = 5.0
    cp = cos(p, pp) / temp
    cm = cos(p, pm) / temp
    # -log(exp(cp) / (exp(cp) + exp(cm))) == log(1 + exp(cm - cp))
    loss = jnp.log(1.0 + jnp.exp(cm - cp))       # (B, 1)
    out_ref[...] = jnp.mean(loss).reshape(1, 1)


def _full_spec(shape):
    return pl.BlockSpec(shape, lambda i: (0,) * len(shape))


def fused_pool_contrastive(cls, cls_minus, cls_plus, w_dense, b_dense):
    B, D = cls.shape
    # torch nn.Linear weight is (out, in); transpose once on the host so the
    # kernel contracts on the standard (1, 0) axes (no in-kernel XLU transpose).
    wt = jnp.transpose(w_dense).astype(jnp.float32)
    out = pl.pallas_call(
        _pool_cl_kernel,
        grid=(1,),
        in_specs=[_full_spec((B, D)), _full_spec((B, D)), _full_spec((B, D)),
                  _full_spec((D, D)), _full_spec((1, D))],
        out_specs=_full_spec((1, 1)),
        out_shape=jax.ShapeDtypeStruct((1, 1), jnp.float32),
    )(cls.astype(jnp.float32), cls_minus.astype(jnp.float32),
      cls_plus.astype(jnp.float32), wt, b_dense.reshape(1, D).astype(jnp.float32))
    return out[0, 0]


# ============================================================================
# Synthetic deterministic parameters & backbone (glue, plain JAX)
# ============================================================================
def init_params(key, vocab_size, embed_dim):
    ks = jax.random.split(key, 4)
    s = 0.02
    return dict(
        emb=jax.random.normal(ks[0], (vocab_size, embed_dim), jnp.float32) * s,
        w_h=jax.random.normal(ks[1], (embed_dim, embed_dim), jnp.float32) * s,
        b_h=jnp.zeros((embed_dim,), jnp.float32),
        w_lm=jax.random.normal(ks[2], (embed_dim, vocab_size), jnp.float32) * s,
        b_lm=jnp.zeros((vocab_size,), jnp.float32),
        # nn.Linear(embed_dim, embed_dim): torch weight layout is (out, in)
        w_dense=jax.random.normal(ks[3], (embed_dim, embed_dim), jnp.float32) * s,
        b_dense=jnp.zeros((embed_dim,), jnp.float32),
    )


def backbone(params, input_ids):
    # stand-in for AutoModelForMaskedLM's encoder: returns last hidden states
    x = params["emb"][input_ids]                           # (B, S, D)
    return jnp.tanh(x @ params["w_h"] + params["b_h"])     # (B, S, D)


def unlog_forward(params, input_ids, input_ids_plus, input_ids_minus, labels,
                  *, tm=None, tv=None, pin_h=None):
    bsz, seqlen = input_ids.shape
    D = params["w_h"].shape[0]

    h = backbone(params, input_ids)
    h_plus = backbone(params, input_ids_plus)
    h_minus = backbone(params, input_ids_minus)

    # ---- MLM loss: tiled fused LM-head + online-softmax CE kernel -----------
    N = bsz * seqlen
    mlm_loss = lmhead_cross_entropy(
        h.reshape(N, D), params["w_lm"], params["b_lm"],
        labels.reshape(-1).astype(jnp.int32), tm=tm, tv=tv, pin_h=pin_h)
    # NOTE: logits_plus / logits_minus are computed-but-unused in the torch
    # forward, so they are skipped here (no observable effect).

    # ---- fused pooler + contrastive-loss kernel ------------------------------
    # torch: pooling_plus = pool(outputs_minus), pooling_minus = pool(outputs_plus)
    cl_loss = fused_pool_contrastive(
        h[:, 0, :], h_minus[:, 0, :], h_plus[:, 0, :],
        params["w_dense"], params["b_dense"])
    return mlm_loss, cl_loss


# ============================================================================
# Pure-JAX reference for verification
# ============================================================================
def unlog_forward_ref(params, input_ids, input_ids_plus, input_ids_minus, labels):
    D = params["w_h"].shape[0]
    h = backbone(params, input_ids)
    h_plus = backbone(params, input_ids_plus)
    h_minus = backbone(params, input_ids_minus)

    logits = h.reshape(-1, D) @ params["w_lm"] + params["b_lm"]
    logp = jax.nn.log_softmax(logits, axis=-1)
    lab = labels.reshape(-1)
    valid = lab != -100
    safe = jnp.where(valid, lab, 0)
    nll = -jnp.take_along_axis(logp, safe[:, None], axis=1)[:, 0]
    mlm = jnp.sum(jnp.where(valid, nll, 0.0)) / jnp.sum(valid)

    def pool(hh):
        return jnp.tanh(hh[:, 0, :] @ params["w_dense"].T + params["b_dense"])

    p, pp, pm = pool(h), pool(h_minus), pool(h_plus)

    def cos(a, b):
        return jnp.sum(a * b, -1) / jnp.maximum(
            jnp.linalg.norm(a, axis=-1) * jnp.linalg.norm(b, axis=-1), 1e-8)

    cp, cm = cos(p, pp) / 5.0, cos(p, pm) / 5.0
    loss = -jnp.log(jnp.exp(cp) / (jnp.exp(cp) + jnp.exp(cm)))
    return mlm, jnp.mean(loss)


# ============================================================================
if __name__ == "__main__":
    bsz, seqlen, embed_dim, vocab_size = 2, 32, 32, 256

    key = jax.random.PRNGKey(0)
    k_par, k_ids, k_idp, k_idm, k_lab, k_msk = jax.random.split(key, 6)

    params = init_params(k_par, vocab_size, embed_dim)

    input_ids = jax.random.randint(k_ids, (bsz, seqlen), 0, vocab_size, jnp.int32)
    input_ids_plus = jax.random.randint(k_idp, (bsz, seqlen), 0, vocab_size, jnp.int32)
    input_ids_minus = jax.random.randint(k_idm, (bsz, seqlen), 0, vocab_size, jnp.int32)

    raw_labels = jax.random.randint(k_lab, (bsz, seqlen), 0, vocab_size, jnp.int32)
    ignore = jax.random.bernoulli(k_msk, 0.3, (bsz, seqlen))
    labels = jnp.where(ignore, -100, raw_labels)
    labels = labels.at[:, 0].set(raw_labels[:, 0])   # ensure >=1 valid label

    mlm_ref, cl_ref = unlog_forward_ref(
        params, input_ids, input_ids_plus, input_ids_minus, labels)

    # small tiles exercise the full (shard, vocab tile, row tile) grid;
    # pin_h=True exercises the VMEM-pinned-h path.
    mlm_loss, cl_loss = unlog_forward(
        params, input_ids, input_ids_plus, input_ids_minus, labels,
        tm=16, tv=128, pin_h=True)
    jax.block_until_ready((mlm_loss, cl_loss))
    assert jnp.allclose(mlm_loss, mlm_ref, atol=1e-3, rtol=1e-3), (mlm_loss, mlm_ref)
    assert jnp.allclose(cl_loss, cl_ref, atol=1e-4, rtol=1e-4), (cl_loss, cl_ref)

    # also exercise the streamed-h path and the default (single-tile) config
    h_flat = backbone(params, input_ids).reshape(bsz * seqlen, embed_dim)
    lab_flat = labels.reshape(-1).astype(jnp.int32)
    mlm_stream = lmhead_cross_entropy(h_flat, params["w_lm"], params["b_lm"],
                                      lab_flat, tm=16, tv=128, pin_h=False)
    mlm_auto = lmhead_cross_entropy(h_flat, params["w_lm"], params["b_lm"],
                                    lab_flat)
    jax.block_until_ready((mlm_stream, mlm_auto))
    assert jnp.allclose(mlm_stream, mlm_ref, atol=1e-3, rtol=1e-3), (mlm_stream, mlm_ref)
    assert jnp.allclose(mlm_auto, mlm_ref, atol=1e-3, rtol=1e-3), (mlm_auto, mlm_ref)

    print("KERNEL_OK")
</pallas_src>

<mosaic_0001>
module attributes {stable_mosaic.version = 11 : i64} {
  func.func @kernel(%arg0: i32, %arg1: i32, %arg2: i32, %arg3: memref<64x32xbf16, #tpu.memory_space<any>>, %arg4: memref<32x128xbf16, #tpu.memory_space<vmem>>, %arg5: memref<1x128xf32, #tpu.memory_space<vmem>>, %arg6: memref<16x1xi32, #tpu.memory_space<vmem>>, %arg7: memref<1x4x128xf32, #tpu.memory_space<vmem>>, %arg8: memref<64x32xbf16, #tpu.memory_space<vmem>>, %arg9: memref<64x3xf32, #tpu.memory_space<vmem>>, %arg10: memref<1x!tpu.dma_semaphore, #tpu.memory_space<semaphore_mem>>) attributes {dimension_semantics = [#tpu.dimension_semantics<parallel>, #tpu.dimension_semantics<arbitrary>, #tpu.dimension_semantics<arbitrary>], iteration_bounds = array<i64: 1, 2, 4>, scalar_prefetch = 0 : i64, scratch_operands = 3 : i64, tpu.core_type = #tpu.core_type<tc>, window_params = [{}, {transform_indices = @transform_1, window_bounds = array<i64: 32, 128>}, {transform_indices = @transform_2, window_bounds = array<i64: 1, 128>}, {transform_indices = @transform_3, window_bounds = array<i64: 16, 1>}, {transform_indices = @transform_4, window_bounds = array<i64: 1, 4, 128>}]} {
    %c0_i32 = arith.constant 0 : i32
    %0 = arith.cmpi eq, %arg1, %c0_i32 : i32
    %c0_i32_0 = arith.constant 0 : i32
    %1 = arith.cmpi eq, %arg2, %c0_i32_0 : i32
    %2 = arith.andi %0, %1 : i1
    %3 = arith.extui %2 : i1 to i32
    %c0_i32_1 = arith.constant 0 : i32
    %4 = arith.cmpi ne, %3, %c0_i32_1 : i32
    scf.if %4 {
      %c64_i32 = arith.constant 64 : i32
      %58 = arith.muli %arg0, %c64_i32 : i32
      %c0_i32_20 = arith.constant 0 : i32
      %c0_i32_21 = arith.constant 0 : i32
      %59 = tpu.memref_slice %arg3[%58, %c0_i32_21] : memref<64x32xbf16, #tpu.memory_space<any>> -> memref<64x32xbf16, #tpu.memory_space<any>>
      %60 = tpu.memref_slice %arg10[%c0_i32_20] : memref<1x!tpu.dma_semaphore, #tpu.memory_space<semaphore_mem>> -> memref<1x!tpu.dma_semaphore, #tpu.memory_space<semaphore_mem>>
      %61 = tpu.memref_squeeze %60 : memref<1x!tpu.dma_semaphore, #tpu.memory_space<semaphore_mem>> -> memref<!tpu.dma_semaphore, #tpu.memory_space<semaphore_mem>>
      tpu.enqueue_dma source(%59 : memref<64x32xbf16, #tpu.memory_space<any>>) target(%arg8 : memref<64x32xbf16, #tpu.memory_space<vmem>>) target_semaphore(%61 : memref<!tpu.dma_semaphore, #tpu.memory_space<semaphore_mem>>)
      %c0_i32_22 = arith.constant 0 : i32
      %c0_i32_23 = arith.constant 0 : i32
      %62 = tpu.memref_slice %arg3[%58, %c0_i32_23] : memref<64x32xbf16, #tpu.memory_space<any>> -> memref<64x32xbf16, #tpu.memory_space<any>>
      %63 = tpu.memref_slice %arg10[%c0_i32_22] : memref<1x!tpu.dma_semaphore, #tpu.memory_space<semaphore_mem>> -> memref<1x!tpu.dma_semaphore, #tpu.memory_space<semaphore_mem>>
      %64 = tpu.memref_squeeze %63 : memref<1x!tpu.dma_semaphore, #tpu.memory_space<semaphore_mem>> -> memref<!tpu.dma_semaphore, #tpu.memory_space<semaphore_mem>>
      tpu.wait_dma2 semaphore(%64 : memref<!tpu.dma_semaphore, #tpu.memory_space<semaphore_mem>>) src(%62 : memref<64x32xbf16, #tpu.memory_space<any>>) dst(%arg8 : memref<64x32xbf16, #tpu.memory_space<vmem>>)
    } else {
    }
    %c16_i32 = arith.constant 16 : i32
    %5 = arith.muli %arg2, %c16_i32 : i32
    %6 = tpu.assume_multiple %5, 16 : i32
    %7 = arith.index_cast %6 : i32 to index
    %c0 = arith.constant 0 : index
    %8 = vector.load %arg8[%7, %c0] : memref<64x32xbf16, #tpu.memory_space<vmem>>, vector<16x32xbf16>
    %c16_i32_2 = arith.constant 16 : i32
    %9 = arith.muli %arg2, %c16_i32_2 : i32
    %10 = tpu.assume_multiple %9, 16 : i32
    %c0_i32_3 = arith.constant 0 : i32
    %11 = arith.cmpi eq, %arg1, %c0_i32_3 : i32
    %12 = arith.extui %11 : i1 to i32
    %c0_i32_4 = arith.constant 0 : i32
    %13 = arith.cmpi ne, %12, %c0_i32_4 : i32
    scf.if %13 {
      %cst_20 = arith.constant -1.000000e+30 : f32
      %58 = vector.broadcast %cst_20 : f32 to vector<16x1xf32>
      %59 = arith.index_cast %10 : i32 to index
      %c0_21 = arith.constant 0 : index
      %60 = vector.load %arg9[%59, %c0_21] : memref<64x3xf32, #tpu.memory_space<vmem>>, vector<16x1xf32>
      tpu.vector_store %arg9[%59, %c0_21], %58 {strides = array<i32>} : memref<64x3xf32, #tpu.memory_space<vmem>>, vector<16x1xf32>,
      %cst_22 = arith.constant 0.000000e+00 : f32
      %61 = vector.broadcast %cst_22 : f32 to vector<16x1xf32>
      %62 = arith.index_cast %10 : i32 to index
      %c1_23 = arith.constant 1 : index
      %63 = vector.load %arg9[%62, %c1_23] : memref<64x3xf32, #tpu.memory_space<vmem>>, vector<16x1xf32>
      tpu.vector_store %arg9[%62, %c1_23], %61 {strides = array<i32>} : memref<64x3xf32, #tpu.memory_space<vmem>>, vector<16x1xf32>,
      %cst_24 = arith.constant 0.000000e+00 : f32
      %64 = vector.broadcast %cst_24 : f32 to vector<16x1xf32>
      %65 = arith.index_cast %10 : i32 to index
      %c2_25 = arith.constant 2 : index
      %66 = vector.load %arg9[%65, %c2_25] : memref<64x3xf32, #tpu.memory_space<vmem>>, vector<16x1xf32>
      tpu.vector_store %arg9[%65, %c2_25], %64 {strides = array<i32>} : memref<64x3xf32, #tpu.memory_space<vmem>>, vector<16x1xf32>,
    } else {
    }
    %c0_5 = arith.constant 0 : index
    %c0_6 = arith.constant 0 : index
    %14 = vector.load %arg4[%c0_5, %c0_6] : memref<32x128xbf16, #tpu.memory_space<vmem>>, vector<32x128xbf16>
    %cst = arith.constant dense<0.000000e+00> : vector<16x128xf32>
    %15 = tpu.matmul %8, %14, %cst {dimension_numbers = #tpu.dot_dimension_numbers<[1], [0], [0], [1], [0, 0, 1, 1], [], []>} : vector<16x32xbf16>, vector<32x128xbf16>, vector<16x128xf32> -> vector<16x128xf32>
    %c0_7 = arith.constant 0 : index
    %c0_8 = arith.constant 0 : index
    %16 = vector.load %arg5[%c0_7, %c0_8] : memref<1x128xf32, #tpu.memory_space<vmem>>, vector<1x128xf32>
    %17 = vector.broadcast %16 : vector<1x128xf32> to vector<16x128xf32>
    %18 = arith.addf %15, %17 : vector<16x128xf32>
    %c0_9 = arith.constant 0 : index
    %c0_10 = arith.constant 0 : index
    %19 = vector.load %arg6[%c0_9, %c0_10] : memref<16x1xi32, #tpu.memory_space<vmem>>, vector<16x1xi32>
    %c128_i32 = arith.constant 128 : i32
    %20 = arith.muli %arg1, %c128_i32 : i32
    %21 = vector.broadcast %20 : i32 to vector<16x1xi32>
    %22 = arith.subi %19, %21 : vector<16x1xi32>
    %23 = tpu.iota {dimensions = array<i32: 1>} : vector<16x128xi32>
    %24 = vector.broadcast %22 : vector<16x1xi32> to vector<16x128xi32>
    %25 = arith.cmpi eq, %23, %24 : vector<16x128xi32>
    %cst_11 = arith.constant 0.000000e+00 : f32
    %26 = vector.broadcast %cst_11 : f32 to vector<16x128xf32>
    %27 = arith.select %25, %18, %26 : vector<16x128xi1>, vector<16x128xf32>
    %cst_12 = arith.constant dense<0.000000e+00> : vector<16xf32>
    %28 = vector.multi_reduction <add>, %27, %cst_12 [1] : vector<16x128xf32> to vector<16xf32>
    %29 = vector.shape_cast %28 : vector<16xf32> to vector<16x1xf32>
    %30 = arith.index_cast %10 : i32 to index
    %c2 = arith.constant 2 : index
    %31 = vector.load %arg9[%30, %c2] : memref<64x3xf32, #tpu.memory_space<vmem>>, vector<16x1xf32>
    %32 = arith.addf %31, %29 : vector<16x1xf32>
    %33 = arith.index_cast %10 : i32 to index
    %c2_13 = arith.constant 2 : index
    %34 = vector.load %arg9[%33, %c2_13] : memref<64x3xf32, #tpu.memory_space<vmem>>, vector<16x1xf32>
    tpu.vector_store %arg9[%33, %c2_13], %32 {strides = array<i32>} : memref<64x3xf32, #tpu.memory_space<vmem>>, vector<16x1xf32>,
    %35 = arith.index_cast %10 : i32 to index
    %c0_14 = arith.constant 0 : index
    %36 = vector.load %arg9[%35, %c0_14] : memref<64x3xf32, #tpu.memory_space<vmem>>, vector<16x1xf32>
    %37 = arith.index_cast %10 : i32 to index
    %c1 = arith.constant 1 : index
    %38 = vector.load %arg9[%37, %c1] : memref<64x3xf32, #tpu.memory_space<vmem>>, vector<16x1xf32>
    %cst_15 = arith.constant dense<0xFF800000> : vector<16xf32>
    %39 = vector.multi_reduction <maximumf>, %18, %cst_15 [1] : vector<16x128xf32> to vector<16xf32>
    %40 = vector.shape_cast %39 : vector<16xf32> to vector<16x1xf32>
    %41 = arith.maximumf %36, %40 : vector<16x1xf32>
    %42 = vector.broadcast %41 : vector<16x1xf32> to vector<16x128xf32>
    %43 = arith.subf %18, %42 : vector<16x128xf32>
    %44 = math.exp %43 : vector<16x128xf32>
    %45 = arith.subf %36, %41 : vector<16x1xf32>
    %46 = math.exp %45 : vector<16x1xf32>
    %47 = arith.mulf %38, %46 : vector<16x1xf32>
    %cst_16 = arith.constant dense<0.000000e+00> : vector<16xf32>
    %48 = vector.multi_reduction <add>, %44, %cst_16 [1] : vector<16x128xf32> to vector<16xf32>
    %49 = vector.shape_cast %48 : vector<16xf32> to vector<16x1xf32>
    %50 = arith.addf %47, %49 : vector<16x1xf32>
    %51 = arith.index_cast %10 : i32 to index
    %c0_17 = arith.constant 0 : index
    %52 = vector.load %arg9[%51, %c0_17] : memref<64x3xf32, #tpu.memory_space<vmem>>, vector<16x1xf32>
    tpu.vector_store %arg9[%51, %c0_17], %41 {strides = array<i32>} : memref<64x3xf32, #tpu.memory_space<vmem>>, vector<16x1xf32>,
    %53 = arith.index_cast %10 : i32 to index
    %c1_18 = arith.constant 1 : index
    %54 = vector.load %arg9[%53, %c1_18] : memref<64x3xf32, #tpu.memory_space<vmem>>, vector<16x1xf32>
    tpu.vector_store %arg9[%53, %c1_18], %50 {strides = array<i32>} : memref<64x3xf32, #tpu.memory_space<vmem>>, vector<16x1xf32>,
    %c1_i32 = arith.constant 1 : i32
    %55 = arith.cmpi eq, %arg1, %c1_i32 : i32
    %56 = arith.extui %55 : i1 to i32
    %c0_i32_19 = arith.constant 0 : i32
    %57 = arith.cmpi ne, %56, %c0_i32_19 : i32
    scf.if %57 {
      %c-100_i32 = arith.constant -100 : i32
      %58 = vector.broadcast %c-100_i32 : i32 to vector<16x1xi32>
      %59 = arith.cmpi ne, %19, %58 : vector<16x1xi32>
      %60 = math.log %50 : vector<16x1xf32>
      %61 = arith.addf %41, %60 : vector<16x1xf32>
      %62 = arith.index_cast %10 : i32 to index
      %c2_20 = arith.constant 2 : index
      %63 = vector.load %arg9[%62, %c2_20] : memref<64x3xf32, #tpu.memory_space<vmem>>, vector<16x1xf32>
      %64 = arith.subf %61, %63 : vector<16x1xf32>
      %cst_21 = arith.constant 0.000000e+00 : f32
      %65 = vector.broadcast %cst_21 : f32 to vector<16x1xf32>
      %66 = arith.select %59, %64, %65 : vector<16x1xi1>, vector<16x1xf32>
      %67 = vector.shape_cast %66 : vector<16x1xf32> to vector<1x16x1xf32>
      %cst_22 = arith.constant dense<0.000000e+00> : vector<1xf32>
      %68 = vector.multi_reduction <add>, %67, %cst_22 [1, 2] : vector<1x16x1xf32> to vector<1xf32>
      %69 = vector.shape_cast %68 : vector<1xf32> to vector<1x1x1xf32>
      %70 = vector.extract %69[0, 0, 0] : f32 from vector<1x1x1xf32>
      %71 = arith.extui %59 : vector<16x1xi1> to vector<16x1xi32>
      %72 = arith.sitofp %71 : vector<16x1xi32> to vector<16x1xf32>
      %73 = vector.shape_cast %72 : vector<16x1xf32> to vector<1x16x1xf32>
      %cst_23 = arith.constant dense<0.000000e+00> : vector<1xf32>
      %74 = vector.multi_reduction <add>, %73, %cst_23 [1, 2] : vector<1x16x1xf32> to vector<1xf32>
      %75 = vector.shape_cast %74 : vector<1xf32> to vector<1x1x1xf32>
      %76 = vector.extract %75[0, 0, 0] : f32 from vector<1x1x1xf32>
      %77 = tpu.iota {dimensions = array<i32: 1>} : vector<1x128xi32>
      %c0_i32_24 = arith.constant 0 : i32
      %78 = vector.broadcast %c0_i32_24 : i32 to vector<1x128xi32>
      %79 = arith.cmpi eq, %77, %78 : vector<1x128xi32>
      %c1_i32_25 = arith.constant 1 : i32
      %80 = vector.broadcast %c1_i32_25 : i32 to vector<1x128xi32>
      %81 = arith.cmpi eq, %77, %80 : vector<1x128xi32>
      %cst_26 = arith.constant 0.000000e+00 : f32
      %82 = vector.broadcast %76 : f32 to vector<1x128xf32>
      %83 = vector.broadcast %cst_26 : f32 to vector<1x128xf32>
      %84 = arith.select %81, %82, %83 : vector<1x128xi1>, vector<1x128xf32>
      %85 = vector.broadcast %70 : f32 to vector<1x128xf32>
      %86 = arith.select %79, %85, %84 : vector<1x128xi1>, vector<1x128xf32>
      %87 = vector.shape_cast %86 : vector<1x128xf32> to vector<1x1x128xf32>
      %c0_27 = arith.constant 0 : index
      %88 = arith.index_cast %arg2 : i32 to index
      %c0_28 = arith.constant 0 : index
      %89 = vector.load %arg7[%c0_27, %88, %c0_28] : memref<1x4x128xf32, #tpu.memory_space<vmem>>, vector<1x1x128xf32>
      tpu.vector_store %arg7[%c0_27, %88, %c0_28], %87 {strides = array<i32>} : memref<1x4x128xf32, #tpu.memory_space<vmem>>, vector<1x1x128xf32>,
    } else {
    }
    return
  }
  func.func @transform_1(%arg0: i32, %arg1: i32, %arg2: i32) -> (i32, i32) {
    %c0_i32 = arith.constant 0 : i32
    %c0_i32_0 = arith.constant 0 : i32
    return %c0_i32, %arg1 : i32, i32
  }
  func.func @transform_2(%arg0: i32, %arg1: i32, %arg2: i32) -> (i32, i32) {
    %c0_i32 = arith.constant 0 : i32
    %c0_i32_0 = arith.constant 0 : i32
    return %c0_i32, %arg1 : i32, i32
  }
  func.func @transform_3(%arg0: i32, %arg1: i32, %arg2: i32) -> (i32, i32) {
    %c4_i32 = arith.constant 4 : i32
    %0 = arith.muli %arg0, %c4_i32 : i32
    %1 = arith.addi %0, %arg2 : i32
    %c0_i32 = arith.constant 0 : i32
    %c0_i32_0 = arith.constant 0 : i32
    return %1, %c0_i32 : i32, i32
  }
  func.func @transform_4(%arg0: i32, %arg1: i32, %arg2: i32) -> (i32, i32, i32) {
    %c0_i32 = arith.constant 0 : i32
    %c0_i32_0 = arith.constant 0 : i32
    %c0_i32_1 = arith.constant 0 : i32
    return %arg0, %c0_i32, %c0_i32_0 : i32, i32, i32
  }
}

</mosaic_0001>

<llo_original>
// kernel: tpu_custom_call.1
$region0: #{tpu_custom_call.1}
  #allocation0 [shape = 'u32[]', space=smem, size = 0x4, offset = 0x4, fixed_abs, tag = 'smem constant byte address 0x4 - core index']
  #allocation1 [shape = 'u32[144,128]{1,0:T(1,128)}', space=vmem, size = 0x12000, scoped, tag = 'internal scratch']
  #allocation2 [shape = 'bf16[64,32]{1,0:T(16,128)(2,1)}', space=vmem, size = 0x4000, scoped, tag = 'scratch operand']
  #allocation3 [shape = 'f32[64,3]{1,0:T(8,128)}', space=vmem, size = 0x8000, scoped, tag = 'scratch operand']
  #allocation4 [shape = 's32[1]{0}', space=sflag, size = 0x4, scoped, tag = 'scratch operand']
  #allocation8 [shape = 's32[]', space=sflag, size = 0x4, offset = 0, fixed_abs, tag = 'sflag constant byte address 0x0 - dummy sync flag']
  %s0 = inlined_call_operand.vmem [shape: bf16[64,32], index: 0, kind: input, shape index: {}]
  %s1 = inlined_call_operand.vmem [shape: bf16[32,256], index: 1, kind: input, shape index: {}]
  %s2 = inlined_call_operand.vmem [shape: f32[1,256], index: 2, kind: input, shape index: {}]
  %s3 = inlined_call_operand.vmem [shape: s32[64,1], index: 3, kind: input, shape index: {}]
  %s4 = inlined_call_operand.hbm [shape: f32[1,4,128], index: 4, kind: output, shape index: {}]
  %s5 = sld [smem:[#allocation0]]
  $region132: #{tpu_custom_call.1} parent=0
    _
  %s7 = ssub.s32 1, %s5
  %s8 = scalar_select 0, %s7, %s5
  $region1: #{tpu_custom_call.1} parent=0
    #allocation5 [shape = 'u8[16384]{0}', space=vmem, size = 0x4000, scoped, tag = 'input window, operand 1']
    #allocation6 [shape = 'u8[2048]{0}', space=vmem, size = 0x800, scoped, tag = 'output window, operand 0, single buffered']
    #allocation7 [shape = 's32[2]{0}', space=sflag, size = 0x8, scoped, tag = 'scoped memory for tpu_custom_call.1']
    %9 = vsyncpa [#allocation7], 0
    loop: start=0, step=1, limit=10
    $region2: #{tpu_custom_call.1} parent=1 // loop_pre_header
      _
    $region3: #{tpu_custom_call.1} parent=1 // loop_header
      %s11 = sphi 0, %s15
      %p12 = scmp.ge.s32.totalorder %s11, 10
      %s18 = sphi 0, %s37
      %s19 = sphi 0, %s33
      %s20 = sphi 0, %s29
      %s21 = sphi 0, %s18
      %s22 = sphi 0, %s19
      %s23 = sphi 0, %s20
      %s24 = sphi 0, %s21
      %s25 = sphi 0, %s22
      %s26 = sphi 0, %s23
      %s40 = sphi 0, %s42
      %s43 = sphi 0, %s40
      %s44 = sphi 0, %s43
      %s60 = sphi 0, %s44
      %s66 = sphi 0, %s68
      %s69 = sphi 0, %s66
      %s70 = sphi 0, %s69
      %s86 = sphi 0, %s70
      %s96 = sphi 0, %s98
      %s99 = sphi 0, %s96
      %s100 = sphi 0, %s99
      %s116 = sphi 0, %s100
      %s122 = sphi 0, %s124
      %s125 = sphi 0, %s122
      %s126 = sphi 0, %s125
      %s142 = sphi 0, %s126
    $region4: #{tpu_custom_call.1} parent=1 // loop_header_branch
      %14 = sbr.rel (%p12) target = $region8
    $region5: #{tpu_custom_call.1} parent=1 // loop_body
      %s16 = ssub.s32 %s11, 1
      %s17 = ssub.s32 %s11, 2
      %s27 = sadd.s32 1, %s20
      %p28 = scmp.ge.s32.totalorder %s27, 4
      %s29 = scalar_select %p28, 0, %s27
      %s30 = sadd.s32 1, %s19
      %s31 = scalar_select %p28, %s30, %s19
      %p32 = scmp.ge.s32.totalorder %s31, 2
      %s33 = scalar_select %p32, 0, %s31
      %s34 = sadd.s32 1, %s18
      %s35 = scalar_select %p32, %s34, %s18
      %p36 = scmp.ge.s32.totalorder %s35, 1
      %s37 = scalar_select %p36, 0, %s35
      %s38 = ssub.s32 %s19, %s33
      %p39 = scmp.eq.s32.totalorder %s38, 0
      %s41 = sadd.s32 %s40, 1
      %s42 = scalar_select %p39, %s40, %s41
      %p45 = pneg %p39
      %p46 = scmp.eq.s32.totalorder %s11, 7
      %p47 = por %p45, %p46
      %p48 = scmp.ne.s32.totalorder %s40, %s43
      %p49 = scmp.eq.s32.totalorder %s11, 0
      %p50 = por %p48, %p49
      %p51 = scmp.ne.s32.totalorder %s40, %s43
      %p52 = scmp.eq.s32.totalorder %s16, 7
      %p53 = por %p51, %p52
      %p54 = scmp.ne.s32.totalorder %s43, %s44
      %p55 = scmp.eq.s32.totalorder %s16, 0
      %p56 = por %p54, %p55
      %p57 = scmp.ne.s32.totalorder %s43, %s44
      %p58 = scmp.eq.s32.totalorder %s17, 7
      %p59 = por %p57, %p58
      %p61 = scmp.ne.s32.totalorder %s44, %s60
      %p62 = scmp.eq.s32.totalorder %s17, 0
      %p63 = por %p61, %p62
      %s64 = ssub.s32 %s19, %s33
      %p65 = scmp.eq.s32.totalorder %s64, 0
      %s67 = sadd.s32 %s66, 1
      %s68 = scalar_select %p65, %s66, %s67
      %p71 = pneg %p65
      %p72 = scmp.eq.s32.totalorder %s11, 7
      %p73 = por %p71, %p72
      %p74 = scmp.ne.s32.totalorder %s66, %s69
      %p75 = scmp.eq.s32.totalorder %s11, 0
      %p76 = por %p74, %p75
      %p77 = scmp.ne.s32.totalorder %s66, %s69
      %p78 = scmp.eq.s32.totalorder %s16, 7
      %p79 = por %p77, %p78
      %p80 = scmp.ne.s32.totalorder %s69, %s70
      %p81 = scmp.eq.s32.totalorder %s16, 0
      %p82 = por %p80, %p81
      %p83 = scmp.ne.s32.totalorder %s69, %s70
      %p84 = scmp.eq.s32.totalorder %s17, 7
      %p85 = por %p83, %p84
      %p87 = scmp.ne.s32.totalorder %s70, %s86
      %p88 = scmp.eq.s32.totalorder %s17, 0
      %p89 = por %p87, %p88
      %s90 = smul.u32 %s18, 4
      %s91 = sadd.s32 %s90, %s20
      %s92 = smul.u32 %s37, 4
      %s93 = sadd.s32 %s92, %s29
      %s94 = ssub.s32 %s91, %s93
      %p95 = scmp.eq.s32.totalorder %s94, 0
      %s97 = sadd.s32 %s96, 1
      %s98 = scalar_select %p95, %s96, %s97
      %p101 = pneg %p95
      %p102 = scmp.eq.s32.totalorder %s11, 7
      %p103 = por %p101, %p102
      %p104 = scmp.ne.s32.totalorder %s96, %s99
      %p105 = scmp.eq.s32.totalorder %s11, 0
      %p106 = por %p104, %p105
      %p107 = scmp.ne.s32.totalorder %s96, %s99
      %p108 = scmp.eq.s32.totalorder %s16, 7
      %p109 = por %p107, %p108
      %p110 = scmp.ne.s32.totalorder %s99, %s100
      %p111 = scmp.eq.s32.totalorder %s16, 0
      %p112 = por %p110, %p111
      %p113 = scmp.ne.s32.totalorder %s99, %s100
      %p114 = scmp.eq.s32.totalorder %s17, 7
      %p115 = por %p113, %p114
      %p117 = scmp.ne.s32.totalorder %s100, %s116
      %p118 = scmp.eq.s32.totalorder %s17, 0
      %p119 = por %p117, %p118
      %s120 = ssub.s32 %s18, %s37
      %p121 = scmp.eq.s32.totalorder %s120, 0
      %s123 = sadd.s32 %s122, 1
      %s124 = scalar_select %p121, %s122, %s123
      %p127 = pneg %p121
      %p128 = scmp.eq.s32.totalorder %s11, 7
      %p129 = por %p127, %p128
      %p130 = scmp.ne.s32.totalorder %s122, %s125
      %p131 = scmp.eq.s32.totalorder %s11, 0
      %p132 = por %p130, %p131
      %p133 = scmp.ne.s32.totalorder %s122, %s125
      %p134 = scmp.eq.s32.totalorder %s16, 7
      %p135 = por %p133, %p134
      %p136 = scmp.ne.s32.totalorder %s125, %s126
      %p137 = scmp.eq.s32.totalorder %s16, 0
      %p138 = por %p136, %p137
      %p139 = scmp.ne.s32.totalorder %s125, %s126
      %p140 = scmp.eq.s32.totalorder %s17, 7
      %p141 = por %p139, %p140
      %p143 = scmp.ne.s32.totalorder %s126, %s142
      %p144 = scmp.eq.s32.totalorder %s17, 0
      %p145 = por %p143, %p144
      %p146 = scmp.le.s32.totalorder 1, %s11
      %p147 = scmp.lt.s32.totalorder %s11, 9
      %p148 = pnand %p146, %p147
      %p149 = pneg %p148
      // Predicated region
      $region9: #{tpu_custom_call.1} parent=5 // pred_check
        _
      $region10: #{tpu_custom_call.1} parent=5 // pred_check_branch
        %151 = sbr.rel (%p148) target = $region12
      $region11: #{tpu_custom_call.1} parent=5 // pred_region
        %s152 = ssub.s32 %s11, 1
      $region12: #{tpu_custom_call.1} parent=5 // pred_fallthru
        _
      %p153 = scmp.lt.s32.totalorder %s11, 8
      // Predicated region
      $region13: #{tpu_custom_call.1} parent=5 // pred_check
        %p154 = pneg %p153
      $region14: #{tpu_custom_call.1} parent=5 // pred_check_branch
        %156 = sbr.rel (%p154) target = $region16
      $region15: #{tpu_custom_call.1} parent=5 // pred_region
        // Predicated region
        $region17: #{tpu_custom_call.1} parent=15 // pred_check
          %p157 = pneg %p50
        $region18: #{tpu_custom_call.1} parent=15 // pred_check_branch
          %159 = sbr.rel (%p157) target = $region20
        $region19: #{tpu_custom_call.1} parent=15 // pred_region
          %s160 = sand.u32 %s40, 1
          %s161 = sand.u32 %s40, 1
          %s162 = smul.addr %s161, 16
          %s163 = scalar_lea.vmem [#allocation5], %s162
          %s164 = smul.addr %s19, 4
          %s165 = scalar_lea.vmem %s1, %s164
          // Predicated region
          $region21: #{tpu_custom_call.1} parent=19 // pred_check
            _
          $region22: #{tpu_custom_call.1} parent=19 // pred_check_branch
            %167 = sbr.rel (0) target = $region24
          $region23: #{tpu_custom_call.1} parent=19 // pred_region
            // Predicated region
            $region25: #{tpu_custom_call.1} parent=23 // pred_check
              _
            $region26: #{tpu_custom_call.1} parent=23 // pred_check_branch
              %169 = sbr.rel target = $region28
            $region27: #{tpu_custom_call.1} parent=23 // pred_region
              // Predicated region
              $region40: #{tpu_custom_call.1} parent=27 // pred_check
                _
              $region41: #{tpu_custom_call.1} parent=27 // pred_check_branch
                %190 = sbr.rel (0) target = $region43
              $region42: #{tpu_custom_call.1} parent=27 // pred_region
                loop: start=0, step=1, limit=1
                $region44: #{tpu_custom_call.1} parent=42 // loop_pre_header
                  _
                $region45: #{tpu_custom_call.1} parent=42 // loop_header
                  %s192 = sphi 0, %s196
                  %p193 = scmp.ge.s32.totalorder %s192, 1
                  %s197 = sphi %s165, %s165
                  %s198 = sphi %s163, %s163
                $region46: #{tpu_custom_call.1} parent=42 // loop_header_branch
                  %195 = sbr.rel (%p193) target = $region50
                $region47: #{tpu_custom_call.1} parent=42 // loop_body
                  _
                $region48: #{tpu_custom_call.1} parent=42 // loop_footer
                  %s196 = sadd.s32 1, %s192
                $region49: #{tpu_custom_call.1} parent=42 // loop_footer_branch
                  %191 = sbr.rel target = $region45
                $region50: #{tpu_custom_call.1} parent=42 // loop_exit
                  _
                loop: start=0, step=1, limit=1
                $region51: #{tpu_custom_call.1} parent=42 // loop_pre_header
                  _
                $region52: #{tpu_custom_call.1} parent=42 // loop_header
                  %s201 = sphi 0, %s205
                  %p202 = scmp.ge.s32.totalorder %s201, 1
                  %s206 = sphi %s165, %s165
                  %s207 = sphi %s163, %s163
                $region53: #{tpu_custom_call.1} parent=42 // loop_header_branch
                  %204 = sbr.rel (%p202) target = $region57
                $region54: #{tpu_custom_call.1} parent=42 // loop_body
                  %v208 = vld [vmem:[%s206] sm:$0xf]
                  %209 = vst [vmem:[%s207] sm:$0xf] %v208
                  %v210 = vld [vmem:[%s206 + $0x8] sm:$0xf]
                  %211 = vst [vmem:[%s207 + $0x4] sm:$0xf] %v210
                  %v212 = vld [vmem:[%s206 + $0x10] sm:$0xf]
                  %213 = vst [vmem:[%s207 + $0x8] sm:$0xf] %v212
                  %v214 = vld [vmem:[%s206 + $0x18] sm:$0xf]
                  %215 = vst [vmem:[%s207 + $0xc] sm:$0xf] %v214
                $region55: #{tpu_custom_call.1} parent=42 // loop_footer
                  %s205 = sadd.s32 1, %s201
                $region56: #{tpu_custom_call.1} parent=42 // loop_footer_branch
                  %200 = sbr.rel target = $region52
                $region57: #{tpu_custom_call.1} parent=42 // loop_exit
                  _
              $region43: #{tpu_custom_call.1} parent=27 // pred_fallthru
                _
            $region28: #{tpu_custom_call.1} parent=23 // pred_fallthru
              _
            // Predicated region
            $region29: #{tpu_custom_call.1} parent=23 // pred_check
              _
            $region30: #{tpu_custom_call.1} parent=23 // pred_check_branch
              %171 = sbr.rel (0) target = $region32
            $region31: #{tpu_custom_call.1} parent=23 // pred_region
              loop: start=0, step=1, limit=1
              $region33: #{tpu_custom_call.1} parent=31 // loop_pre_header
                _
              $region34: #{tpu_custom_call.1} parent=31 // loop_header
                %s174 = sphi 0, %s178
                %p175 = scmp.ge.s32.totalorder %s174, 1
                %s179 = sphi %s165, %s165
                %s180 = sphi %s163, %s163
              $region35: #{tpu_custom_call.1} parent=31 // loop_header_branch
                %177 = sbr.rel (%p175) target = $region39
              $region36: #{tpu_custom_call.1} parent=31 // loop_body
                %v181 = vld [vmem:[%s179] sm:$0xf]
                %182 = vst [vmem:[%s180] sm:$0xf] %v181
                %v183 = vld [vmem:[%s179 + $0x8] sm:$0xf]
                %184 = vst [vmem:[%s180 + $0x4] sm:$0xf] %v183
                %v185 = vld [vmem:[%s179 + $0x10] sm:$0xf]
                %186 = vst [vmem:[%s180 + $0x8] sm:$0xf] %v185
                %v187 = vld [vmem:[%s179 + $0x18] sm:$0xf]
                %188 = vst [vmem:[%s180 + $0xc] sm:$0xf] %v187
              $region37: #{tpu_custom_call.1} parent=31 // loop_footer
                %s178 = sadd.s32 1, %s174
              $region38: #{tpu_custom_call.1} parent=31 // loop_footer_branch
                %173 = sbr.rel target = $region34
              $region39: #{tpu_custom_call.1} parent=31 // loop_exit
                _
            $region32: #{tpu_custom_call.1} parent=23 // pred_fallthru
              _
          $region24: #{tpu_custom_call.1} parent=19 // pred_fallthru
            _
          %216 = vnop
        $region20: #{tpu_custom_call.1} parent=15 // pred_fallthru
          _
        // Predicated region
        $region58: #{tpu_custom_call.1} parent=15 // pred_check
          %p217 = pneg %p76
        $region59: #{tpu_custom_call.1} parent=15 // pred_check_branch
          %219 = sbr.rel (%p217) target = $region61
        $region60: #{tpu_custom_call.1} parent=15 // pred_region
          %p220 = scmp.lt.s32.totalorder %s19, 1
          %s221 = scalar_select %p220, %s19, 1
          %s222 = scalar_lea.vmem %s2, %s221
        $region61: #{tpu_custom_call.1} parent=15 // pred_fallthru
          _
        // Predicated region
        $region62: #{tpu_custom_call.1} parent=15 // pred_check
          %p223 = pneg %p106
        $region63: #{tpu_custom_call.1} parent=15 // pred_check_branch
          %225 = sbr.rel (%p223) target = $region65
        $region64: #{tpu_custom_call.1} parent=15 // pred_region
          %s226 = smul.u32 %s18, 4
          %s227 = sadd.s32 %s226, %s20
          %s228 = smul.u32 2, %s227
          %p229 = scmp.lt.s32.totalorder %s228, 7
          %s230 = scalar_select %p229, %s228, 7
          %s231 = smul.addr %s230, 8
          %s232 = scalar_lea.vmem %s3, %s231
          %s233 = smul.u32 %s18, 4
          %s234 = sadd.s32 %s233, %s20
          %s235 = smul.u32 2, %s234
        $region65: #{tpu_custom_call.1} parent=15 // pred_fallthru
          _
      $region16: #{tpu_custom_call.1} parent=5 // pred_fallthru
        _
      %p236 = scmp.le.s32.totalorder 1, %s11
      %p237 = scmp.lt.s32.totalorder %s11, 9
      %p238 = pnand %p236, %p237
      %p239 = pneg %p238
      // Predicated region
      $region66: #{tpu_custom_call.1} parent=5 // pred_check
        _
      $region67: #{tpu_custom_call.1} parent=5 // pred_check_branch
        %241 = sbr.rel (%p238) target = $region69
      $region68: #{tpu_custom_call.1} parent=5 // pred_region
        %s242 = ssub.s32 %s11, 1
        %s243 = sand.u32 %s43, 1
        %s244 = sand.u32 %s43, 1
        %s245 = smul.addr %s244, 16
        %s246 = scalar_lea.vmem [#allocation5], %s245
        // Predicated region
        $region70: #{tpu_custom_call.1} parent=68 // pred_check
          %p247 = pneg %p56
        $region71: #{tpu_custom_call.1} parent=68 // pred_check_branch
          %249 = sbr.rel (%p247) target = $region73
        $region72: #{tpu_custom_call.1} parent=68 // pred_region
          _
        $region73: #{tpu_custom_call.1} parent=68 // pred_fallthru
          _
        %s250 = sand.u32 %s43, 1
        %s251 = sand.u32 %s43, 1
        %s252 = smul.addr %s251, 16
        %s253 = scalar_lea.vmem [#allocation5], %s252
        %p254 = pneg %p56
        %p255 = pneg %p53
        %p256 = scmp.lt.s32.totalorder %s22, 1
        %s257 = scalar_select %p256, %s22, 1
        %s258 = scalar_lea.vmem %s2, %s257
        %p259 = pneg %p82
        %p260 = pneg %p79
        %s261 = smul.u32 %s21, 4
        %s262 = sadd.s32 %s261, %s23
        %s263 = smul.u32 2, %s262
        %p264 = scmp.lt.s32.totalorder %s263, 7
        %s265 = scalar_select %p264, %s263, 7
        %s266 = smul.addr %s265, 8
        %s267 = scalar_lea.vmem %s3, %s266
        %p268 = pneg %p112
        %p269 = pneg %p109
        %p270 = pneg %p138
        %p271 = pneg %p135
        %p272 = scmp.lt.s32.totalorder %s22, 1
        %s273 = scalar_select %p272, %s22, 1
        %s274 = scalar_lea.vmem %s2, %s273
        %s275 = smul.u32 %s21, 4
        %s276 = sadd.s32 %s275, %s23
        %s277 = smul.u32 2, %s276
        %p278 = scmp.lt.s32.totalorder %s277, 7
        %s279 = scalar_select %p278, %s277, 7
        %s280 = smul.addr %s279, 8
        %s281 = scalar_lea.vmem %s3, %s280
        %s282 = smul.u32 %s21, 4
        %s283 = sadd.s32 %s282, %s23
        %s284 = smul.u32 2, %s283
        %p286 = scmp.eq.s32.totalorder %s22, 0
        %p287 = scmp.eq.s32.totalorder %s23, 0
        %p288 = pnand %p286, %p287
        %p289 = pneg %p288
        // Predicated region
        $region74: #{tpu_custom_call.1} parent=68 // pred_check
          _
        $region75: #{tpu_custom_call.1} parent=68 // pred_check_branch
          %291 = sbr.rel (%p288) target = $region77
        $region76: #{tpu_custom_call.1} parent=68 // pred_region
          %s292 = smul.u32 %s21, 64
          %s293 = sshra.s32 %s292, 3
          %s294 = sand.u32 %s292, 7
          %s295 = smul.addr %s293, 4
          %s296 = scalar_lea.vmem %s0, %s295
          %p298 = scmp.lt.u32.totalorder 32, 8
          %p299 = pneg %p298
          // Predicated region
          $region78: #{tpu_custom_call.1} parent=76 // pred_check
            _
          $region79: #{tpu_custom_call.1} parent=76 // pred_check_branch
            %301 = sbr.rel (%p298) target = $region81
          $region80: #{tpu_custom_call.1} parent=76 // pred_region
            %s316 = sand.u32 32, 7
            %p317 = scmp.eq.s32.totalorder %s316, 0
            // Predicated region
            $region93: #{tpu_custom_call.1} parent=80 // pred_check
              %p318 = pneg %p317
            $region94: #{tpu_custom_call.1} parent=80 // pred_check_branch
              %320 = sbr.rel (%p318) target = $region96
            $region95: #{tpu_custom_call.1} parent=80 // pred_region
              loop: start=0, step=1, limit=1
              $region97: #{tpu_custom_call.1} parent=95 // loop_pre_header
                _
              $region98: #{tpu_custom_call.1} parent=95 // loop_header
                %s322 = sphi 0, %s326
                %p323 = scmp.ge.s32.totalorder %s322, 1
                %s327 = sphi %s296, %s296
                %s328 = sphi [#allocation2], [#allocation2]
              $region99: #{tpu_custom_call.1} parent=95 // loop_header_branch
                %325 = sbr.rel (%p323) target = $region103
              $region100: #{tpu_custom_call.1} parent=95 // loop_body
                %v329 = vld [vmem:[%s327] sm:$0xff]
                %330 = vst [vmem:[%s328] sm:$0xff] %v329
                %v331 = vld [vmem:[%s327 + $0x8] sm:$0xff]
                %332 = vst [vmem:[%s328 + $0x8] sm:$0xff] %v331
                %v333 = vld [vmem:[%s327 + $0x10] sm:$0xff]
                %334 = vst [vmem:[%s328 + $0x10] sm:$0xff] %v333
                %v335 = vld [vmem:[%s327 + $0x18] sm:$0xff]
                %336 = vst [vmem:[%s328 + $0x18] sm:$0xff] %v335
              $region101: #{tpu_custom_call.1} parent=95 // loop_footer
                %s326 = sadd.s32 1, %s322
              $region102: #{tpu_custom_call.1} parent=95 // loop_footer_branch
                %321 = sbr.rel target = $region98
              $region103: #{tpu_custom_call.1} parent=95 // loop_exit
                _
            $region96: #{tpu_custom_call.1} parent=80 // pred_fallthru
              _
            %p337 = pneg %p317
            // Predicated region
            $region104: #{tpu_custom_call.1} parent=80 // pred_check
              _
            $region105: #{tpu_custom_call.1} parent=80 // pred_check_branch
              %339 = sbr.rel (%p317) target = $region107
            $region106: #{tpu_custom_call.1} parent=80 // pred_region
              %s340 = sand.u32 32, 7
            $region107: #{tpu_custom_call.1} parent=80 // pred_fallthru
              _
          $region81: #{tpu_custom_call.1} parent=76 // pred_fallthru
            _
          // Predicated region
          $region82: #{tpu_custom_call.1} parent=76 // pred_check
            %p302 = pneg %p298
          $region83: #{tpu_custom_call.1} parent=76 // pred_check_branch
            %304 = sbr.rel (%p302) target = $region85
          $region84: #{tpu_custom_call.1} parent=76 // pred_region
            %s305 = sshllo.u32 0, 32
            loop: start=0, step=1, limit=1
            $region86: #{tpu_custom_call.1} parent=84 // loop_pre_header
              _
            $region87: #{tpu_custom_call.1} parent=84 // loop_header
              %s307 = sphi 0, %s311
              %p308 = scmp.ge.s32.totalorder %s307, 1
              %s312 = sphi %s296, %s296
              %s313 = sphi [#allocation2], [#allocation2]
            $region88: #{tpu_custom_call.1} parent=84 // loop_header_branch
              %310 = sbr.rel (%p308) target = $region92
            $region89: #{tpu_custom_call.1} parent=84 // loop_body
              %v314 = vld [vmem:[%s312] sm:%s305]
              %315 = vst [vmem:[%s313] sm:%s305] %v314
            $region90: #{tpu_custom_call.1} parent=84 // loop_footer
              %s311 = sadd.s32 1, %s307
            $region91: #{tpu_custom_call.1} parent=84 // loop_footer_branch
              %306 = sbr.rel target = $region87
            $region92: #{tpu_custom_call.1} parent=84 // loop_exit
              _
          $region85: #{tpu_custom_call.1} parent=76 // pred_fallthru
            _
          // Predicated region
          $region108: #{tpu_custom_call.1} parent=76 // pred_check
            _
          $region109: #{tpu_custom_call.1} parent=76 // pred_check_branch
            %343 = sbr.rel (0) target = $region111
          $region110: #{tpu_custom_call.1} parent=76 // pred_region
            %344 = vsyncadd [#allocation4], 512
          $region111: #{tpu_custom_call.1} parent=76 // pred_fallthru
            _
          %s345 = smul.u32 4, 8
          %s346 = smul.u32 %s345, 1
          %s347 = sshll.u32 %s346, 4
          %348 = dma.done [#allocation4], %s347
        $region77: #{tpu_custom_call.1} parent=68 // pred_fallthru
          _
        %s349 = smul.u32 %s23, 16
        %s350 = sshra.s32 %s349, 4
        %s351 = sand.u32 %s349, 15
        %s352 = smul.addr %s350, 8
        %s353 = scalar_lea.vmem [#allocation2], %s352
        %v354 = vld [vmem:[%s353] sm:$0xff]
        // Predicated region
        $region112: #{tpu_custom_call.1} parent=68 // pred_check
          %p355 = pneg %p286
        $region113: #{tpu_custom_call.1} parent=68 // pred_check_branch
          %357 = sbr.rel (%p355) target = $region115
        $region114: #{tpu_custom_call.1} parent=68 // pred_region
          %s358 = scalar_lea.vmem [#allocation3], %s349
          %vm359 = vcmask 7168
          %360 = vst.msk [vmem:[%s358] sm:$0xff] %vm359, -1e+30
          %361 = vst.msk [vmem:[%s358 + $0x8] sm:$0xff] %vm359, -1e+30
          %vm362 = vcmask 15368
          %363 = vst.msk [vmem:[%s358] sm:$0xff] %vm362, 0.0
          %364 = vst.msk [vmem:[%s358 + $0x8] sm:$0xff] %vm362, 0.0
          %vm365 = vcmask 23568
          %366 = vst.msk [vmem:[%s358] sm:$0xff] %vm365, 0.0
          %367 = vst.msk [vmem:[%s358 + $0x8] sm:$0xff] %vm365, 0.0
        $region115: #{tpu_custom_call.1} parent=68 // pred_fallthru
          _
        %v368 = vld [vmem:[%s246] sm:$0xf]
        %v369 = vld [vmem:[%s246 + $0x4] sm:$0xf]
        %v370 = vld [vmem:[%s246 + $0x8] sm:$0xf]
        %v371 = vld [vmem:[%s246 + $0xc] sm:$0xf]
        %v372 = vld [vmem:[%s274] sm:$0x1]
        %v374 = vlaneseq
        %v375 = vshrl.u32 %v374, 7
        %v376 = vsub.s32 0, %v375
        %v377 = vrot.slane %v372, %v376
        %v383 = vunpack.c.l.b16 %v368
        %v384 = vunpack.c.l.b16 %v369
        %v385 = vunpack.c.l.b16 %v370
        %v386 = vunpack.c.l.b16 %v371
        %v387 = vpack.c.b16 %v384, %v383
        %v388 = vpack.c.b16 %v386, %v385
        %vm391 = vcmask 261120
        %v393 = vsel %vm391, %v354, 0
        %395 = vmatprep.subr.bf16.mxu0 0
        %396 = vmatpush1.bf16.msra.mxu0 %v387
        %397 = vmatprep.subr.bf16.mxu0 0
        %398 = vmatpush1.bf16.msra.mxu0 %v388
        %399 = vmatprep.subr.bf16.mxu0 0
        %400 = vmatpush1.bf16.msra.mxu0 0
        %401 = vmatprep.subr.bf16.mxu0 0
        %402 = vmatpush1.bf16.msra.mxu0 0
        %403 = vmatprep.subr.bf16.mxu0 0
        %404 = vmatpush1.bf16.msra.mxu0 0
        %405 = vmatprep.subr.bf16.mxu0 0
        %406 = vmatpush1.bf16.msra.mxu0 0
        %407 = vmatprep.subr.bf16.mxu0 0
        %408 = vmatpush1.bf16.msra.mxu0 0
        %409 = vmatprep.subr.bf16.mxu0 0
        %410 = vmatpush1.bf16.msra.mxu0 0
        %411 = vmatprep.subr.bf16.mxu0 0
        %412 = vmatpush1.bf16.msra.mxu0 0
        %413 = vmatprep.subr.bf16.mxu0 0
        %414 = vmatpush1.bf16.msra.mxu0 0
        %415 = vmatprep.subr.bf16.mxu0 0
        %416 = vmatpush1.bf16.msra.mxu0 0
        %417 = vmatprep.subr.bf16.mxu0 0
        %418 = vmatpush1.bf16.msra.mxu0 0
        %419 = vmatprep.subr.bf16.mxu0 0
        %420 = vmatpush1.bf16.msra.mxu0 0
        %421 = vmatprep.subr.bf16.mxu0 0
        %422 = vmatpush1.bf16.msra.mxu0 0
        %423 = vmatprep.subr.bf16.mxu0 0
        %424 = vmatpush1.bf16.msra.mxu0 0
        %425 = vmatprep.subr.bf16.mxu0 0
        %426 = vmatpush1.bf16.msra.mxu0 0
        %427 = vmatprep.mubr.bf16.mxu0 0
        %428 = vmatmul.mubr.bf16.gmra.mrb[0].mxu0 %v393
        %v429 = vpop.f32.mrb[0].mxu0
        %v430 = vadd.f32 %v377, %v429
        %v431 = vpop.f32.mrb[0].mxu0
        %v432 = vpop.f32.mrb[0].mxu0
        %v433 = vadd.f32 %v377, %v432
        %v434 = vpop.f32.mrb[0].mxu0
        %435 = vdwg.mxu0
        %v436 = vld [vmem:[%s281] sm:$0xff]
        %v437 = vld [vmem:[%s281 + $0x8] sm:$0xff]
        %s438 = smul.u32 %s22, 128
        %v439 = vstv %s438
        %v440 = vsub.s32 %v436, %v439
        %v441 = vsub.s32 %v437, %v439
        %v442 = vlaneseq
        %v443 = vand.u32 %v442, 127
        %444 = vset.pattern.permute.xlu0 0
        %445 = vperm.xlu0 %444, %v440
        %v446 = vpop.permute.xlu0 %445
        %447 = vset.pattern.permute.xlu0 0
        %448 = vperm.xlu0 %447, %v441
        %v449 = vpop.permute.xlu0 %448
        %vm450 = vcmp.eq.s32.totalorder %v443, %v446
        %vm451 = vcmp.eq.s32.totalorder %v443, %v449
        %v452 = vsel %vm450, %v430, 0.0
        %v453 = vsel %vm451, %v433, 0.0
        %454 = vadd.xlane.f32.xlu0 %v452
        %v455 = vpop.xlane.xlu0 %454
        %456 = vadd.xlane.f32.xlu0 %v453
        %v457 = vpop.xlane.xlu0 %456
        %s458 = scalar_lea.vmem [#allocation3], %s349
        %v459 = vld [vmem:[%s458] sm:$0xff]
        %v460 = vld [vmem:[%s458 + $0x8] sm:$0xff]
        %v461 = vadd.f32 %v459, %v455
        %v462 = vadd.f32 %v460, %v457
        %vm463 = vcmask 23568
        %464 = vst.msk [vmem:[%s458] sm:$0xff] %vm463, %v461
        %465 = vst.msk [vmem:[%s458 + $0x8] sm:$0xff] %vm463, %v462
        %v466 = vld [vmem:[%s458] sm:$0xff]
        %v467 = vld [vmem:[%s458 + $0x8] sm:$0xff]
        %468 = vmax.xlane.f32.xlu0 %v430
        %v469 = vpop.xlane.xlu0 %468
        %470 = vmax.xlane.f32.xlu0 %v433
        %v471 = vpop.xlane.xlu0 %470
        %v472 = vmax.f32 %v466, %v469
        %v473 = vmax.f32 %v467, %v471
        %475 = vset.pattern.permute.xlu0 0
        %476 = vperm.xlu0 %475, %v472
        %v477 = vpop.permute.xlu0 %476
        %480 = vset.pattern.permute.xlu0 0
        %481 = vperm.xlu0 %480, %v473
        %v482 = vpop.permute.xlu0 %481
        %v484 = vsub.f32 %v430, %v477
        %v485 = vsub.f32 %v433, %v482
        %v486 = vmul.f32 %v484, 1.442695
        %v487 = vpow.pop %v486
        %v488 = vmul.f32 %v485, 1.442695
        %v489 = vpow.pop %v488
        %v490 = vsub.f32 %v466, %v472
        %v491 = vsub.f32 %v467, %v473
        %v492 = vmul.f32 %v490, 1.442695
        %v493 = vpow.pop %v492
        %v494 = vmul.f32 %v491, 1.442695
        %v495 = vpow.pop %v494
        %498 = vrot.lane.b32.xlu0 %v493, 1
        %v499 = vpop.permute.xlu0 %498
        %500 = vrot.lane.b32.xlu0 %v495, 1
        %v501 = vpop.permute.xlu0 %500
        %v504 = vmul.f32 %v466, %v499
        %v505 = vmul.f32 %v467, %v501
        %506 = vadd.xlane.f32.xlu0 %v487
        %v507 = vpop.xlane.xlu0 %506
        %508 = vadd.xlane.f32.xlu0 %v489
        %v509 = vpop.xlane.xlu0 %508
        %v510 = vadd.f32 %v504, %v507
        %v511 = vadd.f32 %v505, %v509
        %vm512 = vcmask 7168
        %513 = vst.msk [vmem:[%s458] sm:$0xff] %vm512, %v472
        %514 = vst.msk [vmem:[%s458 + $0x8] sm:$0xff] %vm512, %v473
        %vm515 = vcmask 15368
        %516 = vst.msk [vmem:[%s458] sm:$0xff] %vm515, %v510
        %517 = vst.msk [vmem:[%s458 + $0x8] sm:$0xff] %vm515, %v511
        %p518 = scmp.eq.s32.totalorder %s22, 1
        // Predicated region
        $region116: #{tpu_custom_call.1} parent=68 // pred_check
          %p519 = pneg %p518
        $region117: #{tpu_custom_call.1} parent=68 // pred_check_branch
          %521 = sbr.rel (%p519) target = $region119
        $region118: #{tpu_custom_call.1} parent=68 // pred_region
          %vm522 = vcmp.ne.s32.totalorder %v436, 4294967196
          %vm523 = vcmp.ne.s32.totalorder %v437, 4294967196
          %v524 = vlog2.pop %v510
          %v525 = vmul.f32 %v524, 0.6931472
          %v526 = vlog2.pop %v511
          %v527 = vmul.f32 %v526, 0.6931472
          %530 = vrot.lane.b32.xlu0 %v525, 127
          %v531 = vpop.permute.xlu0 %530
          %532 = vrot.lane.b32.xlu0 %v527, 127
          %v533 = vpop.permute.xlu0 %532
          %v536 = vadd.f32 %v472, %v531
          %v537 = vadd.f32 %v473, %v533
          %v538 = vld [vmem:[%s458] sm:$0xff]
          %v539 = vld [vmem:[%s458 + $0x8] sm:$0xff]
          %542 = vrot.lane.b32.xlu0 %v538, 126
          %v543 = vpop.permute.xlu0 %542
          %544 = vrot.lane.b32.xlu0 %v539, 126
          %v545 = vpop.permute.xlu0 %544
          %v548 = vsub.f32 %v536, %v543
          %v549 = vsub.f32 %v537, %v545
          %v550 = vsel %vm522, %v548, 0.0
          %v551 = vsel %vm523, %v549, 0.0
          %v552 = vsel %vm512, %v550, 0.0
          %v553 = vsel %vm512, %v551, 0.0
          %v554 = vadd.f32 %v552, %v553
          %555 = vadd.xlane.f32.xlu0 %v554
          %v556 = vpop.xlane.xlu0 %555
          %v557 = vrot.slane %v556, 4
          %v558 = vadd.f32 %v556, %v557
          %v559 = vrot.slane %v558, 2
          %v560 = vadd.f32 %v558, %v559
          %v561 = vrot.slane %v560, 1
          %v562 = vadd.f32 %v560, %v561
          %s563 = vtos %v562
          %v564 = vsel %vm522, 1, 0
          %v565 = vsel %vm523, 1, 0
          %v566 = vcvt.s32.f32 %v564
          %v567 = vcvt.s32.f32 %v565
          %v568 = vsel %vm512, %v566, 0.0
          %v569 = vsel %vm512, %v567, 0.0
          %v570 = vadd.f32 %v568, %v569
          %571 = vadd.xlane.f32.xlu0 %v570
          %v572 = vpop.xlane.xlu0 %571
          %v573 = vrot.slane %v572, 4
          %v574 = vadd.f32 %v572, %v573
          %v575 = vrot.slane %v574, 2
          %v576 = vadd.f32 %v574, %v575
          %v577 = vrot.slane %v576, 1
          %v578 = vadd.f32 %v576, %v577
          %s579 = vtos %v578
          %vm580 = vcmp.eq.s32.totalorder %v443, 0
          %vm581 = vcmp.eq.s32.totalorder %v443, 1
          %v582 = vstv %s579
          %v583 = vsel %vm581, %v582, 0.0
          %v584 = vstv %s563
          %v585 = vsel %vm580, %v584, %v583
          %s586 = scalar_lea.vmem [#allocation6], %s23
          %587 = vst [vmem:[%s586] sm:$0x1] %v585
        $region119: #{tpu_custom_call.1} parent=68 // pred_fallthru
          _
        // Predicated region
        $region120: #{tpu_custom_call.1} parent=68 // pred_check
          %p588 = pneg %p135
        $region121: #{tpu_custom_call.1} parent=68 // pred_check_branch
          %590 = sbr.rel (%p588) target = $region123
        $region122: #{tpu_custom_call.1} parent=68 // pred_region
          %s592 = ssub.s32 64, 64
          %593 = vsyncadd [#allocation7], %s592
          %s594 = smul.addr %s21, 64
          %s595 = scalar_lea.hbm %s4, %s594
          %s597 = sshll.u32 [#allocation6], 4
          %s598 = int_to_ptr.vmem [resolvable:$true] %s597
          %600 = dma.vmem_to_hbm [thread:$0]  %s598, 64, %s595, [#allocation7]
        $region123: #{tpu_custom_call.1} parent=68 // pred_fallthru
          _
        // Predicated region
        $region124: #{tpu_custom_call.1} parent=68 // pred_check
          %p601 = pneg %p135
        $region125: #{tpu_custom_call.1} parent=68 // pred_check_branch
          %603 = sbr.rel (%p601) target = $region127
        $region126: #{tpu_custom_call.1} parent=68 // pred_region
          %604 = dma.done [#allocation7], 64
        $region127: #{tpu_custom_call.1} parent=68 // pred_fallthru
          _
      $region69: #{tpu_custom_call.1} parent=5 // pred_fallthru
        _
      %p605 = scmp.le.s32.totalorder 2, %s11
      // Predicated region
      $region128: #{tpu_custom_call.1} parent=5 // pred_check
        %p606 = pneg %p605
      $region129: #{tpu_custom_call.1} parent=5 // pred_check_branch
        %608 = sbr.rel (%p606) target = $region131
      $region130: #{tpu_custom_call.1} parent=5 // pred_region
        %s609 = ssub.s32 %s11, 2
      $region131: #{tpu_custom_call.1} parent=5 // pred_fallthru
        _
    $region6: #{tpu_custom_call.1} parent=1 // loop_footer
      %s15 = sadd.s32 1, %s11
    $region7: #{tpu_custom_call.1} parent=1 // loop_footer_branch
      %10 = sbr.rel target = $region3
    $region8: #{tpu_custom_call.1} parent=1 // loop_exit
      _
    %610 = vsyncpa [#allocation7], 1
    %s611 = scalar_lea.sflag [#allocation7], 1
    %612 = vsyncpa %s611, 1
  %613 = vsyncmov [#allocation4]
  %s614 = vpop.sfrf %613
  %p615 = scmp.eq.s32.totalorder %s614, 0
  %p616 = pneg %p615
  %618 = shalt.err (%p616)

</llo_original>
